<compile_context>
chip_gen: v7x
topology: tpu7x:2x2x1
jax: 0.10.0
libtpu: 0.0.40
codegen_flags: <defaults>
</compile_context>

<pallas_src>
import jax
import jax.numpy as jnp
from jax.experimental import pallas as pl
from jax.experimental.pallas import tpu as pltpu


def _yolo_kernel(off_ref, scale_ref, pred_ref, out_ref):
    # off_ref:   (2, tn)            f32  -- row 0: grid_x*stride, row 1: grid_y*stride
    # scale_ref: (A, attrs, 1)      f32  -- rows 0,1: stride; rows 2,3: raw anchor w/h; else 1
    # pred_ref:  (1, A, attrs, tn)  input block
    # out_ref:   (1, A, tn, attrs)  output block (transposed layout, written directly)
    p = pred_ref[0].astype(jnp.float32)                      # (A, attrs, tn)

    # sublane-row index along the attrs axis; rows 2,3 (w,h) take the exp path.
    row = jax.lax.broadcasted_iota(jnp.int32, p.shape, 1)
    is_wh = jnp.logical_and(row >= 2, row < 4)

    # Full-vreg EUP passes + a single select (no width-1 sublane slicing).
    val = jnp.where(is_wh, jnp.exp(p), jax.nn.sigmoid(p))

    # Per-(anchor, attr) multiplicative constants (stride already folded in).
    val = val * scale_ref[...]                               # lane-broadcast of (A, attrs, 1)

    # Additive grid offsets (already *stride): row 0 -> gx, row 1 -> gy, others -> 0.
    gx = off_ref[0:1, :][None, :, :]                         # (1, 1, tn)
    gy = off_ref[1:2, :][None, :, :]                         # (1, 1, tn)
    add = jnp.where(row == 0, gx, jnp.where(row == 1, gy, 0.0))
    val = val + add

    # Fold the attrs<->N transpose into the kernel so the wrapper reshape is free.
    out_ref[0] = jnp.swapaxes(val, 1, 2).astype(out_ref.dtype)   # (A, tn, attrs)


def yolo_layer(x, anchors, num_classes, img_dim, *, tn_target=512):
    """x: (bs, num_anchors*(5+num_classes), g, g) NCHW.
    Returns (bs, num_anchors*g*g, 5+num_classes) matching the PyTorch forward (targets=None)."""
    bs, c, g, g2 = x.shape
    A = len(anchors)
    attrs = 5 + num_classes
    assert c == A * attrs and g == g2
    n = g * g
    stride = float(img_dim) / float(g)

    # Lane tile: multiple of 128, capped at tn_target; pad the spatial axis if needed.
    n128 = ((n + 127) // 128) * 128
    tn = min(((tn_target + 127) // 128) * 128, n128)
    n_pad = ((n + tn - 1) // tn) * tn

    # Equivalent of .view(bs, A, attrs, g*g) on the contiguous NCHW tensor (free reshape).
    pred = x.reshape(bs, A, attrs, n)
    if n_pad != n:
        pred = jnp.pad(pred, ((0, 0), (0, 0), (0, 0), (0, n_pad - n)))

    # Host-precomputed grid offsets, with stride folded in (cells row-major: n = i*g + j).
    idx = jnp.arange(n_pad, dtype=jnp.int32)
    off = jnp.stack(
        [
            (idx % g).astype(jnp.float32) * stride,   # grid_x * stride
            (idx // g).astype(jnp.float32) * stride,  # grid_y * stride
        ],
        axis=0,
    )  # (2, n_pad)

    # Per-(anchor, attr) scale, stride folded: exp(w)*(a_w/stride)*stride == exp(w)*a_w.
    anc = jnp.asarray(anchors, jnp.float32)                   # (A, 2)
    scale = jnp.ones((A, attrs), jnp.float32)
    scale = scale.at[:, 0].set(stride).at[:, 1].set(stride)
    scale = scale.at[:, 2].set(anc[:, 0]).at[:, 3].set(anc[:, 1])
    scale = scale[:, :, None]                                 # (A, attrs, 1)

    grid = (bs, n_pad // tn)
    out = pl.pallas_call(
        _yolo_kernel,
        out_shape=jax.ShapeDtypeStruct((bs, A, n_pad, attrs), x.dtype),
        grid=grid,
        in_specs=[
            pl.BlockSpec((2, tn), lambda b, t: (0, t)),
            pl.BlockSpec((A, attrs, 1), lambda b, t: (0, 0, 0)),
            pl.BlockSpec((1, A, attrs, tn), lambda b, t: (b, 0, 0, t)),
        ],
        out_specs=pl.BlockSpec((1, A, tn, attrs), lambda b, t: (b, 0, t, 0)),
        compiler_params=pltpu.CompilerParams(
            dimension_semantics=("parallel", "parallel"),
        ),
    )(off, scale, pred)

    if n_pad != n:
        out = out[:, :, :n, :]
    return out.reshape(bs, A * n, attrs)


def yolo_layer_ref(x, anchors, num_classes, img_dim):
    """Pure-JAX reference mirroring the PyTorch forward (targets=None)."""
    bs, c, g, _ = x.shape
    A = len(anchors)
    stride = float(img_dim) / float(g)
    pred = x.astype(jnp.float32).reshape(bs, A, 5 + num_classes, g, g).transpose(0, 1, 3, 4, 2)
    sx = jax.nn.sigmoid(pred[..., 0])
    sy = jax.nn.sigmoid(pred[..., 1])
    w = pred[..., 2]
    h = pred[..., 3]
    conf = jax.nn.sigmoid(pred[..., 4])
    cls = jax.nn.sigmoid(pred[..., 5:])
    gx = jnp.arange(g, dtype=jnp.float32)[None, None, None, :]
    gy = jnp.arange(g, dtype=jnp.float32)[None, None, :, None]
    scaled = jnp.asarray(anchors, jnp.float32) / stride
    aw = scaled[:, 0][None, :, None, None]
    ah = scaled[:, 1][None, :, None, None]
    bx = sx + gx
    by = sy + gy
    bw = jnp.exp(w) * aw
    bh = jnp.exp(h) * ah
    boxes = jnp.stack([bx, by, bw, bh], axis=-1).reshape(bs, -1, 4) * stride
    return jnp.concatenate(
        [boxes, conf.reshape(bs, -1, 1), cls.reshape(bs, -1, num_classes)], axis=-1
    )


if __name__ == "__main__":
    key = jax.random.PRNGKey(0)

    # Test 1: 3 anchors, 3 classes (attrs=8), grid 16x16 (N=256), img_dim 32, batch 2.
    # tn_target=128 exercises multiple lane tiles per batch element.
    anchors1 = [(10.0, 13.0), (16.0, 30.0), (33.0, 23.0)]
    num_classes1, img_dim1, bs1, g1 = 3, 32, 2, 16
    attrs1 = 5 + num_classes1
    x1 = jax.random.normal(key, (bs1, len(anchors1) * attrs1, g1, g1), dtype=jnp.float32)

    out1 = jax.block_until_ready(yolo_layer(x1, anchors1, num_classes1, img_dim1, tn_target=128))
    ref1 = yolo_layer_ref(x1, anchors1, num_classes1, img_dim1)
    assert out1.shape == (bs1, len(anchors1) * g1 * g1, attrs1), out1.shape
    assert jnp.allclose(out1, ref1, atol=1e-4, rtol=1e-4), "mismatch vs reference (test 1)"

    # Test 2: realistic-style config needing lane padding: g=13 (N=169 -> padded to 256).
    anchors2 = [(116.0, 90.0), (156.0, 198.0), (373.0, 326.0)]
    num_classes2, img_dim2, bs2, g2 = 3, 416, 1, 13
    attrs2 = 5 + num_classes2
    key2 = jax.random.PRNGKey(0)
    x2 = jax.random.normal(key2, (bs2, len(anchors2) * attrs2, g2, g2), dtype=jnp.float32)

    out2 = jax.block_until_ready(yolo_layer(x2, anchors2, num_classes2, img_dim2))
    ref2 = yolo_layer_ref(x2, anchors2, num_classes2, img_dim2)
    assert out2.shape == (bs2, len(anchors2) * g2 * g2, attrs2), out2.shape
    assert jnp.allclose(out2, ref2, atol=1e-4, rtol=1e-4), "mismatch vs reference (test 2)"

    print("KERNEL_OK")
</pallas_src>

<mosaic_0001>
module attributes {stable_mosaic.version = 11 : i64} {
  func.func @_yolo_kernel(%arg0: i32, %arg1: i32, %arg2: memref<2x128xf32, #tpu.memory_space<vmem>>, %arg3: memref<3x8x1xf32, #tpu.memory_space<vmem>>, %arg4: memref<1x3x8x128xf32, #tpu.memory_space<vmem>>, %arg5: memref<1x3x128x8xf32, #tpu.memory_space<vmem>>) attributes {dimension_semantics = [#tpu.dimension_semantics<parallel>, #tpu.dimension_semantics<parallel>], iteration_bounds = array<i64: 2, 2>, scalar_prefetch = 0 : i64, scratch_operands = 0 : i64, tpu.core_type = #tpu.core_type<tc>, window_params = [{transform_indices = @transform_0, window_bounds = array<i64: 2, 128>}, {pipeline_mode = #tpu.pipeline_mode<synchronous>, transform_indices = @transform_1, window_bounds = array<i64: 3, 8, 1>}, {transform_indices = @transform_2, window_bounds = array<i64: 1, 3, 8, 128>}, {transform_indices = @transform_3, window_bounds = array<i64: 1, 3, 128, 8>}]} {
    %c0 = arith.constant 0 : index
    %c0_0 = arith.constant 0 : index
    %c0_1 = arith.constant 0 : index
    %c0_2 = arith.constant 0 : index
    %0 = vector.load %arg4[%c0, %c0_0, %c0_1, %c0_2] : memref<1x3x8x128xf32, #tpu.memory_space<vmem>>, vector<1x3x8x128xf32>
    %1 = vector.shape_cast %0 : vector<1x3x8x128xf32> to vector<3x8x128xf32>
    %2 = tpu.iota {dimensions = array<i32: 1>} : vector<3x8x128xi32>
    %c2_i32 = arith.constant 2 : i32
    %3 = vector.broadcast %c2_i32 : i32 to vector<3x8x128xi32>
    %4 = arith.cmpi sge, %2, %3 : vector<3x8x128xi32>
    %c4_i32 = arith.constant 4 : i32
    %5 = vector.broadcast %c4_i32 : i32 to vector<3x8x128xi32>
    %6 = arith.cmpi slt, %2, %5 : vector<3x8x128xi32>
    %7 = arith.andi %4, %6 : vector<3x8x128xi1>
    %8 = math.exp %1 : vector<3x8x128xf32>
    %9 = arith.negf %1 : vector<3x8x128xf32>
    %10 = math.exp %9 : vector<3x8x128xf32>
    %cst = arith.constant 1.000000e+00 : f32
    %11 = vector.broadcast %cst : f32 to vector<3x8x128xf32>
    %12 = arith.addf %11, %10 : vector<3x8x128xf32>
    %13 = arith.divf %11, %12 : vector<3x8x128xf32>
    %14 = arith.select %7, %8, %13 : vector<3x8x128xi1>, vector<3x8x128xf32>
    %c0_3 = arith.constant 0 : index
    %c0_4 = arith.constant 0 : index
    %c0_5 = arith.constant 0 : index
    %15 = vector.load %arg3[%c0_3, %c0_4, %c0_5] : memref<3x8x1xf32, #tpu.memory_space<vmem>>, vector<3x8x1xf32>
    %16 = vector.broadcast %15 : vector<3x8x1xf32> to vector<3x8x128xf32>
    %17 = arith.mulf %14, %16 : vector<3x8x128xf32>
    %c0_6 = arith.constant 0 : index
    %c0_7 = arith.constant 0 : index
    %18 = vector.load %arg2[%c0_6, %c0_7] : memref<2x128xf32, #tpu.memory_space<vmem>>, vector<1x128xf32>
    %19 = vector.shape_cast %18 : vector<1x128xf32> to vector<1x1x128xf32>
    %c1 = arith.constant 1 : index
    %c0_8 = arith.constant 0 : index
    %20 = vector.load %arg2[%c1, %c0_8] : memref<2x128xf32, #tpu.memory_space<vmem>>, vector<1x128xf32>
    %21 = vector.shape_cast %20 : vector<1x128xf32> to vector<1x1x128xf32>
    %c0_i32 = arith.constant 0 : i32
    %22 = vector.broadcast %c0_i32 : i32 to vector<3x8x128xi32>
    %23 = arith.cmpi eq, %2, %22 : vector<3x8x128xi32>
    %c1_i32 = arith.constant 1 : i32
    %24 = vector.broadcast %c1_i32 : i32 to vector<3x8x128xi32>
    %25 = arith.cmpi eq, %2, %24 : vector<3x8x128xi32>
    %cst_9 = arith.constant 0.000000e+00 : f32
    %26 = vector.shape_cast %21 : vector<1x1x128xf32> to vector<1x1x128xf32>
    %27 = vector.broadcast %26 : vector<1x1x128xf32> to vector<3x8x128xf32>
    %28 = vector.broadcast %cst_9 : f32 to vector<3x8x128xf32>
    %29 = arith.select %25, %27, %28 : vector<3x8x128xi1>, vector<3x8x128xf32>
    %30 = vector.shape_cast %19 : vector<1x1x128xf32> to vector<1x1x128xf32>
    %31 = vector.broadcast %30 : vector<1x1x128xf32> to vector<3x8x128xf32>
    %32 = arith.select %23, %31, %29 : vector<3x8x128xi1>, vector<3x8x128xf32>
    %33 = arith.addf %17, %32 : vector<3x8x128xf32>
    %34 = tpu.transpose %33, [0, 2, 1] : vector<3x8x128xf32> -> vector<3x128x8xf32>
    %c0_10 = arith.constant 0 : index
    %c0_11 = arith.constant 0 : index
    %c0_12 = arith.constant 0 : index
    %c0_13 = arith.constant 0 : index
    %35 = vector.load %arg5[%c0_10, %c0_11, %c0_12, %c0_13] : memref<1x3x128x8xf32, #tpu.memory_space<vmem>>, vector<1x3x128x8xf32>
    %36 = vector.shape_cast %35 : vector<1x3x128x8xf32> to vector<3x128x8xf32>
    %37 = vector.shape_cast %34 : vector<3x128x8xf32> to vector<1x3x128x8xf32>
    tpu.vector_store %arg5[%c0_10, %c0_11, %c0_12, %c0_13], %37 {strides = array<i32>} : memref<1x3x128x8xf32, #tpu.memory_space<vmem>>, vector<1x3x128x8xf32>,
    return
  }
  func.func @transform_0(%arg0: i32, %arg1: i32) -> (i32, i32) {
    %c0_i32 = arith.constant 0 : i32
    %c0_i32_0 = arith.constant 0 : i32
    return %c0_i32, %arg1 : i32, i32
  }
  func.func @transform_1(%arg0: i32, %arg1: i32) -> (i32, i32, i32) {
    %c0_i32 = arith.constant 0 : i32
    %c0_i32_0 = arith.constant 0 : i32
    %c0_i32_1 = arith.constant 0 : i32
    %c0_i32_2 = arith.constant 0 : i32
    return %c0_i32, %c0_i32_0, %c0_i32_1 : i32, i32, i32
  }
  func.func @transform_2(%arg0: i32, %arg1: i32) -> (i32, i32, i32, i32) {
    %c0_i32 = arith.constant 0 : i32
    %c0_i32_0 = arith.constant 0 : i32
    %c0_i32_1 = arith.constant 0 : i32
    return %arg0, %c0_i32, %c0_i32_0, %arg1 : i32, i32, i32, i32
  }
  func.func @transform_3(%arg0: i32, %arg1: i32) -> (i32, i32, i32, i32) {
    %c0_i32 = arith.constant 0 : i32
    %c0_i32_0 = arith.constant 0 : i32
    %c0_i32_1 = arith.constant 0 : i32
    return %arg0, %c0_i32, %arg1, %c0_i32_0 : i32, i32, i32, i32
  }
}

</mosaic_0001>

<llo_original>
// kernel: tpu_custom_call.1
$region0: #{tpu_custom_call.1}
  #allocation0 [shape = 'u32[]', space=smem, size = 0x4, offset = 0x4, fixed_abs, tag = 'smem constant byte address 0x4 - core index']
  #allocation1 [shape = 'u32[144,128]{1,0:T(1,128)}', space=vmem, size = 0x12000, scoped, tag = 'internal scratch']
  %s0 = inlined_call_operand.vmem [shape: f32[2,256], index: 0, kind: input, shape index: {}]
  %s1 = inlined_call_operand.vmem [shape: f32[3,8,1], index: 1, kind: input, shape index: {}]
  %s2 = inlined_call_operand.hbm [shape: f32[2,3,8,256], index: 2, kind: input, shape index: {}]
  %s3 = inlined_call_operand.vmem [shape: f32[2,3,256,8], index: 3, kind: output, shape index: {}]
  %s4 = sld [smem:[#allocation0]]
  $region83: #{tpu_custom_call.1} parent=0
    _
  %s6 = ssub.s32 1, %s4
  %s7 = scalar_select 0, %s6, %s4
  $region1: #{tpu_custom_call.1} parent=0
    #allocation2 [shape = 'u8[24576]{0}', space=vmem, size = 0x6000, scoped, tag = 'input window, operand 2']
    #allocation3 [shape = 's32[2]{0}', space=sflag, size = 0x8, scoped, tag = 'scoped memory for tpu_custom_call.1']
    #allocation4 [shape = 'u8[393216]{0}', space=vmem, size = 0x60000, scoped, tag = 'output window, operand 0']
    %8 = vsyncpa [#allocation3], 0
    %s9 = scalar_lea.sflag [#allocation3], 1
    %10 = vsyncpa %s9, 0
    loop: start=0, step=1, limit=6
    $region2: #{tpu_custom_call.1} parent=1 // loop_pre_header
      _
    $region3: #{tpu_custom_call.1} parent=1 // loop_header
      %s12 = sphi 0, %s16
      %p13 = scmp.ge.s32.totalorder %s12, 6
      %s19 = sphi 0, %s31
      %s20 = sphi 0, %s27
      %s21 = sphi 0, %s19
      %s22 = sphi 0, %s20
      %s23 = sphi 0, %s21
      %s24 = sphi 0, %s22
      %s34 = sphi 0, %s36
      %s37 = sphi 0, %s34
      %s38 = sphi 0, %s37
      %s54 = sphi 0, %s38
      %s58 = sphi 0, %s58
      %s60 = sphi 0, %s58
      %s61 = sphi 0, %s60
      %s75 = sphi 0, %s61
      %s83 = sphi 0, %s85
      %s86 = sphi 0, %s83
      %s87 = sphi 0, %s86
      %s103 = sphi 0, %s87
      %s111 = sphi 0, %s113
      %s114 = sphi 0, %s111
      %s115 = sphi 0, %s114
      %s131 = sphi 0, %s115
    $region4: #{tpu_custom_call.1} parent=1 // loop_header_branch
      %15 = sbr.rel (%p13) target = $region8
    $region5: #{tpu_custom_call.1} parent=1 // loop_body
      %s17 = ssub.s32 %s12, 1
      %s18 = ssub.s32 %s12, 2
      %s25 = sadd.s32 1, %s20
      %p26 = scmp.ge.s32.totalorder %s25, 2
      %s27 = scalar_select %p26, 0, %s25
      %s28 = sadd.s32 1, %s19
      %s29 = scalar_select %p26, %s28, %s19
      %p30 = scmp.ge.s32.totalorder %s29, 2
      %s31 = scalar_select %p30, 0, %s29
      %s32 = ssub.s32 %s20, %s27
      %p33 = scmp.eq.s32.totalorder %s32, 0
      %s35 = sadd.s32 %s34, 1
      %s36 = scalar_select %p33, %s34, %s35
      %p39 = pneg %p33
      %p40 = scmp.eq.s32.totalorder %s12, 3
      %p41 = por %p39, %p40
      %p42 = scmp.ne.s32.totalorder %s34, %s37
      %p43 = scmp.eq.s32.totalorder %s12, 0
      %p44 = por %p42, %p43
      %p45 = scmp.ne.s32.totalorder %s34, %s37
      %p46 = scmp.eq.s32.totalorder %s17, 3
      %p47 = por %p45, %p46
      %p48 = scmp.ne.s32.totalorder %s37, %s38
      %p49 = scmp.eq.s32.totalorder %s17, 0
      %p50 = por %p48, %p49
      %p51 = scmp.ne.s32.totalorder %s37, %s38
      %p52 = scmp.eq.s32.totalorder %s18, 3
      %p53 = por %p51, %p52
      %p55 = scmp.ne.s32.totalorder %s38, %s54
      %p56 = scmp.eq.s32.totalorder %s18, 0
      %p57 = por %p55, %p56
      %s59 = sadd.s32 %s58, 1
      %p62 = scmp.eq.s32.totalorder %s12, 3
      %p63 = scmp.ne.s32.totalorder %s58, %s60
      %p64 = scmp.eq.s32.totalorder %s12, 0
      %p65 = por %p63, %p64
      %p66 = scmp.ne.s32.totalorder %s58, %s60
      %p67 = scmp.eq.s32.totalorder %s17, 3
      %p68 = por %p66, %p67
      %p69 = scmp.ne.s32.totalorder %s60, %s61
      %p70 = scmp.eq.s32.totalorder %s17, 0
      %p71 = por %p69, %p70
      %p72 = scmp.ne.s32.totalorder %s60, %s61
      %p73 = scmp.eq.s32.totalorder %s18, 3
      %p74 = por %p72, %p73
      %p76 = scmp.ne.s32.totalorder %s61, %s75
      %p77 = scmp.eq.s32.totalorder %s18, 0
      %p78 = por %p76, %p77
      %s79 = ssub.s32 %s19, %s31
      %s80 = ssub.s32 %s20, %s27
      %s81 = sor.u32 %s79, %s80
      %p82 = scmp.eq.s32.totalorder %s81, 0
      %s84 = sadd.s32 %s83, 1
      %s85 = scalar_select %p82, %s83, %s84
      %p88 = pneg %p82
      %p89 = scmp.eq.s32.totalorder %s12, 3
      %p90 = por %p88, %p89
      %p91 = scmp.ne.s32.totalorder %s83, %s86
      %p92 = scmp.eq.s32.totalorder %s12, 0
      %p93 = por %p91, %p92
      %p94 = scmp.ne.s32.totalorder %s83, %s86
      %p95 = scmp.eq.s32.totalorder %s17, 3
      %p96 = por %p94, %p95
      %p97 = scmp.ne.s32.totalorder %s86, %s87
      %p98 = scmp.eq.s32.totalorder %s17, 0
      %p99 = por %p97, %p98
      %p100 = scmp.ne.s32.totalorder %s86, %s87
      %p101 = scmp.eq.s32.totalorder %s18, 3
      %p102 = por %p100, %p101
      %p104 = scmp.ne.s32.totalorder %s87, %s103
      %p105 = scmp.eq.s32.totalorder %s18, 0
      %p106 = por %p104, %p105
      %s107 = ssub.s32 %s19, %s31
      %s108 = ssub.s32 %s20, %s27
      %s109 = sor.u32 %s107, %s108
      %p110 = scmp.eq.s32.totalorder %s109, 0
      %s112 = sadd.s32 %s111, 1
      %s113 = scalar_select %p110, %s111, %s112
      %p116 = pneg %p110
      %p117 = scmp.eq.s32.totalorder %s12, 3
      %p118 = por %p116, %p117
      %p119 = scmp.ne.s32.totalorder %s111, %s114
      %p120 = scmp.eq.s32.totalorder %s12, 0
      %p121 = por %p119, %p120
      %p122 = scmp.ne.s32.totalorder %s111, %s114
      %p123 = scmp.eq.s32.totalorder %s17, 3
      %p124 = por %p122, %p123
      %p125 = scmp.ne.s32.totalorder %s114, %s115
      %p126 = scmp.eq.s32.totalorder %s17, 0
      %p127 = por %p125, %p126
      %p128 = scmp.ne.s32.totalorder %s114, %s115
      %p129 = scmp.eq.s32.totalorder %s18, 3
      %p130 = por %p128, %p129
      %p132 = scmp.ne.s32.totalorder %s115, %s131
      %p133 = scmp.eq.s32.totalorder %s18, 0
      %p134 = por %p132, %p133
      %p135 = scmp.le.s32.totalorder 1, %s12
      %p136 = scmp.lt.s32.totalorder %s12, 5
      %p137 = pnand %p135, %p136
      %p138 = pneg %p137
      // Predicated region
      $region9: #{tpu_custom_call.1} parent=5 // pred_check
        _
      $region10: #{tpu_custom_call.1} parent=5 // pred_check_branch
        %140 = sbr.rel (%p137) target = $region12
      $region11: #{tpu_custom_call.1} parent=5 // pred_region
        %s141 = ssub.s32 %s12, 1
        // Predicated region
        $region13: #{tpu_custom_call.1} parent=11 // pred_check
          %p142 = pneg %p71
        $region14: #{tpu_custom_call.1} parent=11 // pred_check_branch
          %144 = sbr.rel (%p142) target = $region16
        $region15: #{tpu_custom_call.1} parent=11 // pred_region
          _
        $region16: #{tpu_custom_call.1} parent=11 // pred_fallthru
          _
      $region12: #{tpu_custom_call.1} parent=5 // pred_fallthru
        _
      %p145 = scmp.lt.s32.totalorder %s12, 4
      // Predicated region
      $region17: #{tpu_custom_call.1} parent=5 // pred_check
        %p146 = pneg %p145
      $region18: #{tpu_custom_call.1} parent=5 // pred_check_branch
        %148 = sbr.rel (%p146) target = $region20
      $region19: #{tpu_custom_call.1} parent=5 // pred_region
        // Predicated region
        $region21: #{tpu_custom_call.1} parent=19 // pred_check
          %p149 = pneg %p44
        $region22: #{tpu_custom_call.1} parent=19 // pred_check_branch
          %151 = sbr.rel (%p149) target = $region24
        $region23: #{tpu_custom_call.1} parent=19 // pred_region
          %p152 = scmp.lt.s32.totalorder %s20, 1
          %s153 = scalar_select %p152, %s20, 1
          %s154 = smul.addr %s153, 2
          %s155 = scalar_lea.vmem %s0, %s154
        $region24: #{tpu_custom_call.1} parent=19 // pred_fallthru
          _
        // Predicated region
        $region25: #{tpu_custom_call.1} parent=19 // pred_check
          %p156 = pneg %p93
        $region26: #{tpu_custom_call.1} parent=19 // pred_check_branch
          %158 = sbr.rel (%p156) target = $region28
        $region27: #{tpu_custom_call.1} parent=19 // pred_region
          %s159 = sand.u32 %s83, 1
          %s160 = scalar_lea.sflag [#allocation3], %s159
          %s161 = sand.u32 %s83, 1
          %s162 = smul.addr %s161, 24
          %s163 = scalar_lea.vmem [#allocation2], %s162
          %s165 = ssub.s32 384, 384
          %166 = vsyncadd %s160, %s165
          %s167 = smul.addr %s19, 6
          %s168 = sadd.s32 %s20, %s167
          %s169 = smul.addr %s168, 128
          %s170 = scalar_lea.hbm %s2, %s169
          %s171 = sshll.u32 %s163, 4
          %s172 = int_to_ptr.vmem [resolvable:$true] %s171
          %177 = dma.hbm_to_vmem [thread:$0]  %s170, 384, %s172, %s160, 256, 128, 8
        $region28: #{tpu_custom_call.1} parent=19 // pred_fallthru
          _
      $region20: #{tpu_custom_call.1} parent=5 // pred_fallthru
        _
      %p178 = scmp.le.s32.totalorder 1, %s12
      %p179 = scmp.lt.s32.totalorder %s12, 5
      %p180 = pnand %p178, %p179
      %p181 = pneg %p180
      // Predicated region
      $region29: #{tpu_custom_call.1} parent=5 // pred_check
        _
      $region30: #{tpu_custom_call.1} parent=5 // pred_check_branch
        %183 = sbr.rel (%p180) target = $region32
      $region31: #{tpu_custom_call.1} parent=5 // pred_region
        %s184 = ssub.s32 %s12, 1
        %s185 = sand.u32 %s86, 1
        %s186 = scalar_lea.sflag [#allocation3], %s185
        %s187 = sand.u32 %s86, 1
        %s188 = smul.addr %s187, 24
        %s189 = scalar_lea.vmem [#allocation2], %s188
        // Predicated region
        $region33: #{tpu_custom_call.1} parent=31 // pred_check
          %p190 = pneg %p99
        $region34: #{tpu_custom_call.1} parent=31 // pred_check_branch
          %192 = sbr.rel (%p190) target = $region36
        $region35: #{tpu_custom_call.1} parent=31 // pred_region
          %193 = dma.done %s186, 384
        $region36: #{tpu_custom_call.1} parent=31 // pred_fallthru
          _
        %p194 = scmp.lt.s32.totalorder %s22, 1
        %s195 = scalar_select %p194, %s22, 1
        %s196 = smul.addr %s195, 2
        %s197 = scalar_lea.vmem %s0, %s196
        %p198 = pneg %p50
        %p199 = pneg %p47
        %p200 = pneg %p71
        %p201 = pneg %p68
        %s202 = sand.u32 %s86, 1
        %s203 = scalar_lea.sflag [#allocation3], %s202
        %s204 = sand.u32 %s86, 1
        %s205 = smul.addr %s204, 24
        %s206 = scalar_lea.vmem [#allocation2], %s205
        %p207 = pneg %p99
        %p208 = pneg %p96
        %p209 = pneg %p127
        %p210 = pneg %p124
        %s211 = sand.u32 %s114, 1
        %s212 = sand.u32 %s114, 1
        %s213 = smul.addr %s212, 384
        %s214 = scalar_lea.vmem [#allocation4], %s213
        %p215 = scmp.lt.s32.totalorder %s22, 1
        %s216 = scalar_select %p215, %s22, 1
        %s217 = smul.addr %s216, 2
        %s218 = scalar_lea.vmem %s0, %s217
        %s219 = smul.u32 16, %s22
        %v220 = vld [vmem:[%s189] sm:$0xff]
        %v221 = vld [vmem:[%s189 + $0x8] sm:$0xff]
        %v222 = vld [vmem:[%s189 + $0x10] sm:$0xff]
        %v223 = vlaneseq
        %v224 = vshrl.u32 %v223, 7
        %vm225 = vcmp.ge.s32.totalorder %v224, 2
        %vm226 = vcmp.lt.s32.totalorder %v224, 4
        %vm227 = vmand %vm225, %vm226
        %v228 = vmul.f32 %v220, 1.442695
        %v229 = vpow.pop %v228
        %v230 = vmul.f32 %v221, 1.442695
        %v231 = vpow.pop %v230
        %v232 = vmul.f32 %v222, 1.442695
        %v233 = vpow.pop %v232
        %v234 = vxor.u32 %v220, 2147483648
        %v235 = vxor.u32 %v221, 2147483648
        %v236 = vxor.u32 %v222, 2147483648
        %v237 = vmul.f32 %v234, 1.442695
        %v238 = vpow.pop %v237
        %v239 = vmul.f32 %v235, 1.442695
        %v240 = vpow.pop %v239
        %v241 = vmul.f32 %v236, 1.442695
        %v242 = vpow.pop %v241
        %v243 = vadd.f32 %v238, 1.0
        %v244 = vadd.f32 %v240, 1.0
        %v245 = vadd.f32 %v242, 1.0
        %v246 = vrcp.pop %v243
        %v247 = vmul.f32 1.0, %v246
        %v248 = vrcp.pop %v244
        %v249 = vmul.f32 1.0, %v248
        %v250 = vrcp.pop %v245
        %v251 = vmul.f32 1.0, %v250
        %v252 = vsel %vm227, %v229, %v247
        %v253 = vsel %vm227, %v231, %v249
        %v254 = vsel %vm227, %v233, %v251
        %v255 = vld [vmem:[%s1] sm:$0xff]
        %v256 = vld [vmem:[%s1 + $0x8] sm:$0xff]
        %v257 = vld [vmem:[%s1 + $0x10] sm:$0xff]
        %259 = vset.pattern.permute.xlu0 0
        %260 = vperm.xlu0 %259, %v255
        %v261 = vpop.permute.xlu0 %260
        %264 = vset.pattern.permute.xlu0 0
        %265 = vperm.xlu0 %264, %v256
        %v266 = vpop.permute.xlu0 %265
        %269 = vset.pattern.permute.xlu0 0
        %270 = vperm.xlu0 %269, %v257
        %v271 = vpop.permute.xlu0 %270
        %v273 = vmul.f32 %v252, %v261
        %v274 = vmul.f32 %v253, %v266
        %v275 = vmul.f32 %v254, %v271
        %v276 = vld [vmem:[%s218] sm:$0x1]
        %v277 = vld [vmem:[%s218 + $0x1] sm:$0x1]
        %vm278 = vcmp.eq.s32.totalorder %v224, 0
        %vm279 = vcmp.eq.s32.totalorder %v224, 1
        %v280 = vlaneseq
        %v281 = vshrl.u32 %v280, 7
        %v282 = vsub.s32 0, %v281
        %v283 = vrot.slane %v277, %v282
        %v284 = vsel %vm279, %v283, 0.0
        %v285 = vlaneseq
        %v286 = vshrl.u32 %v285, 7
        %v287 = vsub.s32 0, %v286
        %v288 = vrot.slane %v276, %v287
        %v289 = vsel %vm278, %v288, %v284
        %v290 = vadd.f32 %v273, %v289
        %v291 = vadd.f32 %v274, %v289
        %v292 = vadd.f32 %v275, %v289
        %293 = vxpose.xlu0.b32.start [1/16] %v290, 128
        %294 = vxpose.xlu0.b32.cont [2/16] 0.0, 128
        %295 = vxpose.xlu0.b32.cont [3/16] 0.0, 128
        %296 = vxpose.xlu0.b32.cont [4/16] 0.0, 128
        %297 = vxpose.xlu0.b32.cont [5/16] 0.0, 128
        %298 = vxpose.xlu0.b32.cont [6/16] 0.0, 128
        %299 = vxpose.xlu0.b32.cont [7/16] 0.0, 128
        %300 = vxpose.xlu0.b32.cont [8/16] 0.0, 128
        %301 = vxpose.xlu0.b32.cont [9/16] 0.0, 128
        %302 = vxpose.xlu0.b32.cont [10/16] 0.0, 128
        %303 = vxpose.xlu0.b32.cont [11/16] 0.0, 128
        %304 = vxpose.xlu0.b32.cont [12/16] 0.0, 128
        %305 = vxpose.xlu0.b32.cont [13/16] 0.0, 128
        %306 = vxpose.xlu0.b32.cont [14/16] 0.0, 128
        %307 = vxpose.xlu0.b32.cont [15/16] 0.0, 128
        %308 = vxpose.xlu0.b32.end [16/16] 0.0, 128
        %v309 = vpop.trf.xlu0
        %v310 = vpop.trf.xlu0
        %v311 = vpop.trf.xlu0
        %v312 = vpop.trf.xlu0
        %v313 = vpop.trf.xlu0
        %v314 = vpop.trf.xlu0
        %v315 = vpop.trf.xlu0
        %v316 = vpop.trf.xlu0
        %v317 = vpop.trf.xlu0
        %v318 = vpop.trf.xlu0
        %v319 = vpop.trf.xlu0
        %v320 = vpop.trf.xlu0
        %v321 = vpop.trf.xlu0
        %v322 = vpop.trf.xlu0
        %v323 = vpop.trf.xlu0
        %v324 = vpop.trf.xlu0
        %325 = vxpose.xlu0.b32.start [1/16] %v291, 128
        %326 = vxpose.xlu0.b32.cont [2/16] 0.0, 128
        %327 = vxpose.xlu0.b32.cont [3/16] 0.0, 128
        %328 = vxpose.xlu0.b32.cont [4/16] 0.0, 128
        %329 = vxpose.xlu0.b32.cont [5/16] 0.0, 128
        %330 = vxpose.xlu0.b32.cont [6/16] 0.0, 128
        %331 = vxpose.xlu0.b32.cont [7/16] 0.0, 128
        %332 = vxpose.xlu0.b32.cont [8/16] 0.0, 128
        %333 = vxpose.xlu0.b32.cont [9/16] 0.0, 128
        %334 = vxpose.xlu0.b32.cont [10/16] 0.0, 128
        %335 = vxpose.xlu0.b32.cont [11/16] 0.0, 128
        %336 = vxpose.xlu0.b32.cont [12/16] 0.0, 128
        %337 = vxpose.xlu0.b32.cont [13/16] 0.0, 128
        %338 = vxpose.xlu0.b32.cont [14/16] 0.0, 128
        %339 = vxpose.xlu0.b32.cont [15/16] 0.0, 128
        %340 = vxpose.xlu0.b32.end [16/16] 0.0, 128
        %v341 = vpop.trf.xlu0
        %v342 = vpop.trf.xlu0
        %v343 = vpop.trf.xlu0
        %v344 = vpop.trf.xlu0
        %v345 = vpop.trf.xlu0
        %v346 = vpop.trf.xlu0
        %v347 = vpop.trf.xlu0
        %v348 = vpop.trf.xlu0
        %v349 = vpop.trf.xlu0
        %v350 = vpop.trf.xlu0
        %v351 = vpop.trf.xlu0
        %v352 = vpop.trf.xlu0
        %v353 = vpop.trf.xlu0
        %v354 = vpop.trf.xlu0
        %v355 = vpop.trf.xlu0
        %v356 = vpop.trf.xlu0
        %357 = vxpose.xlu0.b32.start [1/16] %v292, 128
        %358 = vxpose.xlu0.b32.cont [2/16] 0.0, 128
        %359 = vxpose.xlu0.b32.cont [3/16] 0.0, 128
        %360 = vxpose.xlu0.b32.cont [4/16] 0.0, 128
        %361 = vxpose.xlu0.b32.cont [5/16] 0.0, 128
        %362 = vxpose.xlu0.b32.cont [6/16] 0.0, 128
        %363 = vxpose.xlu0.b32.cont [7/16] 0.0, 128
        %364 = vxpose.xlu0.b32.cont [8/16] 0.0, 128
        %365 = vxpose.xlu0.b32.cont [9/16] 0.0, 128
        %366 = vxpose.xlu0.b32.cont [10/16] 0.0, 128
        %367 = vxpose.xlu0.b32.cont [11/16] 0.0, 128
        %368 = vxpose.xlu0.b32.cont [12/16] 0.0, 128
        %369 = vxpose.xlu0.b32.cont [13/16] 0.0, 128
        %370 = vxpose.xlu0.b32.cont [14/16] 0.0, 128
        %371 = vxpose.xlu0.b32.cont [15/16] 0.0, 128
        %372 = vxpose.xlu0.b32.end [16/16] 0.0, 128
        %v373 = vpop.trf.xlu0
        %v374 = vpop.trf.xlu0
        %v375 = vpop.trf.xlu0
        %v376 = vpop.trf.xlu0
        %v377 = vpop.trf.xlu0
        %v378 = vpop.trf.xlu0
        %v379 = vpop.trf.xlu0
        %v380 = vpop.trf.xlu0
        %v381 = vpop.trf.xlu0
        %v382 = vpop.trf.xlu0
        %v383 = vpop.trf.xlu0
        %v384 = vpop.trf.xlu0
        %v385 = vpop.trf.xlu0
        %v386 = vpop.trf.xlu0
        %v387 = vpop.trf.xlu0
        %v388 = vpop.trf.xlu0
        %vm389 = vcmask 64512
        %390 = vst.msk [vmem:[%s214] sm:$0xff] %vm389, %v309
        %391 = vst.msk [vmem:[%s214 + $0x8] sm:$0xff] %vm389, %v310
        %392 = vst.msk [vmem:[%s214 + $0x10] sm:$0xff] %vm389, %v311
        %393 = vst.msk [vmem:[%s214 + $0x18] sm:$0xff] %vm389, %v312
        %394 = vst.msk [vmem:[%s214 + $0x20] sm:$0xff] %vm389, %v313
        %395 = vst.msk [vmem:[%s214 + $0x28] sm:$0xff] %vm389, %v314
        %396 = vst.msk [vmem:[%s214 + $0x30] sm:$0xff] %vm389, %v315
        %397 = vst.msk [vmem:[%s214 + $0x38] sm:$0xff] %vm389, %v316
        %398 = vst.msk [vmem:[%s214 + $0x40] sm:$0xff] %vm389, %v317
        %399 = vst.msk [vmem:[%s214 + $0x48] sm:$0xff] %vm389, %v318
        %400 = vst.msk [vmem:[%s214 + $0x50] sm:$0xff] %vm389, %v319
        %401 = vst.msk [vmem:[%s214 + $0x58] sm:$0xff] %vm389, %v320
        %402 = vst.msk [vmem:[%s214 + $0x60] sm:$0xff] %vm389, %v321
        %403 = vst.msk [vmem:[%s214 + $0x68] sm:$0xff] %vm389, %v322
        %404 = vst.msk [vmem:[%s214 + $0x70] sm:$0xff] %vm389, %v323
        %405 = vst.msk [vmem:[%s214 + $0x78] sm:$0xff] %vm389, %v324
        %406 = vst.msk [vmem:[%s214 + $0x80] sm:$0xff] %vm389, %v341
        %407 = vst.msk [vmem:[%s214 + $0x88] sm:$0xff] %vm389, %v342
        %408 = vst.msk [vmem:[%s214 + $0x90] sm:$0xff] %vm389, %v343
        %409 = vst.msk [vmem:[%s214 + $0x98] sm:$0xff] %vm389, %v344
        %410 = vst.msk [vmem:[%s214 + $0xa0] sm:$0xff] %vm389, %v345
        %411 = vst.msk [vmem:[%s214 + $0xa8] sm:$0xff] %vm389, %v346
        %412 = vst.msk [vmem:[%s214 + $0xb0] sm:$0xff] %vm389, %v347
        %413 = vst.msk [vmem:[%s214 + $0xb8] sm:$0xff] %vm389, %v348
        %414 = vst.msk [vmem:[%s214 + $0xc0] sm:$0xff] %vm389, %v349
        %415 = vst.msk [vmem:[%s214 + $0xc8] sm:$0xff] %vm389, %v350
        %416 = vst.msk [vmem:[%s214 + $0xd0] sm:$0xff] %vm389, %v351
        %417 = vst.msk [vmem:[%s214 + $0xd8] sm:$0xff] %vm389, %v352
        %418 = vst.msk [vmem:[%s214 + $0xe0] sm:$0xff] %vm389, %v353
        %419 = vst.msk [vmem:[%s214 + $0xe8] sm:$0xff] %vm389, %v354
        %420 = vst.msk [vmem:[%s214 + $0xf0] sm:$0xff] %vm389, %v355
        %421 = vst.msk [vmem:[%s214 + $0xf8] sm:$0xff] %vm389, %v356
        %422 = vst.msk [vmem:[%s214 + $0x100] sm:$0xff] %vm389, %v373
        %423 = vst.msk [vmem:[%s214 + $0x108] sm:$0xff] %vm389, %v374
        %424 = vst.msk [vmem:[%s214 + $0x110] sm:$0xff] %vm389, %v375
        %425 = vst.msk [vmem:[%s214 + $0x118] sm:$0xff] %vm389, %v376
        %426 = vst.msk [vmem:[%s214 + $0x120] sm:$0xff] %vm389, %v377
        %427 = vst.msk [vmem:[%s214 + $0x128] sm:$0xff] %vm389, %v378
        %428 = vst.msk [vmem:[%s214 + $0x130] sm:$0xff] %vm389, %v379
        %429 = vst.msk [vmem:[%s214 + $0x138] sm:$0xff] %vm389, %v380
        %430 = vst.msk [vmem:[%s214 + $0x140] sm:$0xff] %vm389, %v381
        %431 = vst.msk [vmem:[%s214 + $0x148] sm:$0xff] %vm389, %v382
        %432 = vst.msk [vmem:[%s214 + $0x150] sm:$0xff] %vm389, %v383
        %433 = vst.msk [vmem:[%s214 + $0x158] sm:$0xff] %vm389, %v384
        %434 = vst.msk [vmem:[%s214 + $0x160] sm:$0xff] %vm389, %v385
        %435 = vst.msk [vmem:[%s214 + $0x168] sm:$0xff] %vm389, %v386
        %436 = vst.msk [vmem:[%s214 + $0x170] sm:$0xff] %vm389, %v387
        %437 = vst.msk [vmem:[%s214 + $0x178] sm:$0xff] %vm389, %v388
        %s438 = sand.u32 %s114, 1
        %s439 = sand.u32 %s114, 1
        %s440 = smul.addr %s439, 384
        %s441 = scalar_lea.vmem [#allocation4], %s440
        // Predicated region
        $region37: #{tpu_custom_call.1} parent=31 // pred_check
          %p442 = pneg %p124
        $region38: #{tpu_custom_call.1} parent=31 // pred_check_branch
          %444 = sbr.rel (%p442) target = $region40
        $region39: #{tpu_custom_call.1} parent=31 // pred_region
          %s445 = smul.u32 16, %s22
          %s446 = smul.addr %s21, 96
          %s447 = sadd.s32 %s445, %s446
          %s448 = smul.addr %s447, 8
          %s449 = scalar_lea.vmem %s3, %s448
          // Predicated region
          $region41: #{tpu_custom_call.1} parent=39 // pred_check
            _
          $region42: #{tpu_custom_call.1} parent=39 // pred_check_branch
            %451 = sbr.rel (0) target = $region44
          $region43: #{tpu_custom_call.1} parent=39 // pred_region
            // Predicated region
            $region45: #{tpu_custom_call.1} parent=43 // pred_check
              _
            $region46: #{tpu_custom_call.1} parent=43 // pred_check_branch
              %453 = sbr.rel (0) target = $region48
            $region47: #{tpu_custom_call.1} parent=43 // pred_region
              // Predicated region
              $region60: #{tpu_custom_call.1} parent=47 // pred_check
                _
              $region61: #{tpu_custom_call.1} parent=47 // pred_check_branch
                %562 = sbr.rel (0) target = $region63
              $region62: #{tpu_custom_call.1} parent=47 // pred_region
                loop: start=0, step=1, limit=1
                $region64: #{tpu_custom_call.1} parent=62 // loop_pre_header
                  _
                $region65: #{tpu_custom_call.1} parent=62 // loop_header
                  %s564 = sphi 0, %s568
                  %p565 = scmp.ge.s32.totalorder %s564, 1
                  %s569 = sphi %s441, %s441
                  %s570 = sphi %s449, %s449
                $region66: #{tpu_custom_call.1} parent=62 // loop_header_branch
                  %567 = sbr.rel (%p565) target = $region70
                $region67: #{tpu_custom_call.1} parent=62 // loop_body
                  %v571 = vld [vmem:[%s569] sm:$0xff]
                  %572 = vst [vmem:[%s570] sm:$0xff] %v571
                  %v573 = vld [vmem:[%s569 + $0x8] sm:$0xff]
                  %574 = vst [vmem:[%s570 + $0x8] sm:$0xff] %v573
                  %v575 = vld [vmem:[%s569 + $0x10] sm:$0xff]
                  %576 = vst [vmem:[%s570 + $0x10] sm:$0xff] %v575
                  %v577 = vld [vmem:[%s569 + $0x18] sm:$0xff]
                  %578 = vst [vmem:[%s570 + $0x18] sm:$0xff] %v577
                  %v579 = vld [vmem:[%s569 + $0x20] sm:$0xff]
                  %580 = vst [vmem:[%s570 + $0x20] sm:$0xff] %v579
                  %v581 = vld [vmem:[%s569 + $0x28] sm:$0xff]
                  %582 = vst [vmem:[%s570 + $0x28] sm:$0xff] %v581
                  %v583 = vld [vmem:[%s569 + $0x30] sm:$0xff]
                  %584 = vst [vmem:[%s570 + $0x30] sm:$0xff] %v583
                  %v585 = vld [vmem:[%s569 + $0x38] sm:$0xff]
                  %586 = vst [vmem:[%s570 + $0x38] sm:$0xff] %v585
                  %v587 = vld [vmem:[%s569 + $0x40] sm:$0xff]
                  %588 = vst [vmem:[%s570 + $0x40] sm:$0xff] %v587
                  %v589 = vld [vmem:[%s569 + $0x48] sm:$0xff]
                  %590 = vst [vmem:[%s570 + $0x48] sm:$0xff] %v589
                  %v591 = vld [vmem:[%s569 + $0x50] sm:$0xff]
                  %592 = vst [vmem:[%s570 + $0x50] sm:$0xff] %v591
                  %v593 = vld [vmem:[%s569 + $0x58] sm:$0xff]
                  %594 = vst [vmem:[%s570 + $0x58] sm:$0xff] %v593
                  %v595 = vld [vmem:[%s569 + $0x60] sm:$0xff]
                  %596 = vst [vmem:[%s570 + $0x60] sm:$0xff] %v595
                  %v597 = vld [vmem:[%s569 + $0x68] sm:$0xff]
                  %598 = vst [vmem:[%s570 + $0x68] sm:$0xff] %v597
                  %v599 = vld [vmem:[%s569 + $0x70] sm:$0xff]
                  %600 = vst [vmem:[%s570 + $0x70] sm:$0xff] %v599
                  %v601 = vld [vmem:[%s569 + $0x78] sm:$0xff]
                  %602 = vst [vmem:[%s570 + $0x78] sm:$0xff] %v601
                  %v603 = vld [vmem:[%s569 + $0x80] sm:$0xff]
                  %604 = vst [vmem:[%s570 + $0x100] sm:$0xff] %v603
                  %v605 = vld [vmem:[%s569 + $0x88] sm:$0xff]
                  %606 = vst [vmem:[%s570 + $0x108] sm:$0xff] %v605
                  %v607 = vld [vmem:[%s569 + $0x90] sm:$0xff]
                  %608 = vst [vmem:[%s570 + $0x110] sm:$0xff] %v607
                  %v609 = vld [vmem:[%s569 + $0x98] sm:$0xff]
                  %610 = vst [vmem:[%s570 + $0x118] sm:$0xff] %v609
                  %v611 = vld [vmem:[%s569 + $0xa0] sm:$0xff]
                  %612 = vst [vmem:[%s570 + $0x120] sm:$0xff] %v611
                  %v613 = vld [vmem:[%s569 + $0xa8] sm:$0xff]
                  %614 = vst [vmem:[%s570 + $0x128] sm:$0xff] %v613
                  %v615 = vld [vmem:[%s569 + $0xb0] sm:$0xff]
                  %616 = vst [vmem:[%s570 + $0x130] sm:$0xff] %v615
                  %v617 = vld [vmem:[%s569 + $0xb8] sm:$0xff]
                  %618 = vst [vmem:[%s570 + $0x138] sm:$0xff] %v617
                  %v619 = vld [vmem:[%s569 + $0xc0] sm:$0xff]
                  %620 = vst [vmem:[%s570 + $0x140] sm:$0xff] %v619
                  %v621 = vld [vmem:[%s569 + $0xc8] sm:$0xff]
                  %622 = vst [vmem:[%s570 + $0x148] sm:$0xff] %v621
                  %v623 = vld [vmem:[%s569 + $0xd0] sm:$0xff]
                  %624 = vst [vmem:[%s570 + $0x150] sm:$0xff] %v623
                  %v625 = vld [vmem:[%s569 + $0xd8] sm:$0xff]
                  %626 = vst [vmem:[%s570 + $0x158] sm:$0xff] %v625
                  %v627 = vld [vmem:[%s569 + $0xe0] sm:$0xff]
                  %628 = vst [vmem:[%s570 + $0x160] sm:$0xff] %v627
                  %v629 = vld [vmem:[%s569 + $0xe8] sm:$0xff]
                  %630 = vst [vmem:[%s570 + $0x168] sm:$0xff] %v629
                  %v631 = vld [vmem:[%s569 + $0xf0] sm:$0xff]
                  %632 = vst [vmem:[%s570 + $0x170] sm:$0xff] %v631
                  %v633 = vld [vmem:[%s569 + $0xf8] sm:$0xff]
                  %634 = vst [vmem:[%s570 + $0x178] sm:$0xff] %v633
                  %v635 = vld [vmem:[%s569 + $0x100] sm:$0xff]
                  %636 = vst [vmem:[%s570 + $0x200] sm:$0xff] %v635
                  %v637 = vld [vmem:[%s569 + $0x108] sm:$0xff]
                  %638 = vst [vmem:[%s570 + $0x208] sm:$0xff] %v637
                  %v639 = vld [vmem:[%s569 + $0x110] sm:$0xff]
                  %640 = vst [vmem:[%s570 + $0x210] sm:$0xff] %v639
                  %v641 = vld [vmem:[%s569 + $0x118] sm:$0xff]
                  %642 = vst [vmem:[%s570 + $0x218] sm:$0xff] %v641
                  %v643 = vld [vmem:[%s569 + $0x120] sm:$0xff]
                  %644 = vst [vmem:[%s570 + $0x220] sm:$0xff] %v643
                  %v645 = vld [vmem:[%s569 + $0x128] sm:$0xff]
                  %646 = vst [vmem:[%s570 + $0x228] sm:$0xff] %v645
                  %v647 = vld [vmem:[%s569 + $0x130] sm:$0xff]
                  %648 = vst [vmem:[%s570 + $0x230] sm:$0xff] %v647
                  %v649 = vld [vmem:[%s569 + $0x138] sm:$0xff]
                  %650 = vst [vmem:[%s570 + $0x238] sm:$0xff] %v649
                  %v651 = vld [vmem:[%s569 + $0x140] sm:$0xff]
                  %652 = vst [vmem:[%s570 + $0x240] sm:$0xff] %v651
                  %v653 = vld [vmem:[%s569 + $0x148] sm:$0xff]
                  %654 = vst [vmem:[%s570 + $0x248] sm:$0xff] %v653
                  %v655 = vld [vmem:[%s569 + $0x150] sm:$0xff]
                  %656 = vst [vmem:[%s570 + $0x250] sm:$0xff] %v655
                  %v657 = vld [vmem:[%s569 + $0x158] sm:$0xff]
                  %658 = vst [vmem:[%s570 + $0x258] sm:$0xff] %v657
                  %v659 = vld [vmem:[%s569 + $0x160] sm:$0xff]
                  %660 = vst [vmem:[%s570 + $0x260] sm:$0xff] %v659
                  %v661 = vld [vmem:[%s569 + $0x168] sm:$0xff]
                  %662 = vst [vmem:[%s570 + $0x268] sm:$0xff] %v661
                  %v663 = vld [vmem:[%s569 + $0x170] sm:$0xff]
                  %664 = vst [vmem:[%s570 + $0x270] sm:$0xff] %v663
                  %v665 = vld [vmem:[%s569 + $0x178] sm:$0xff]
                  %666 = vst [vmem:[%s570 + $0x278] sm:$0xff] %v665
                $region68: #{tpu_custom_call.1} parent=62 // loop_footer
                  %s568 = sadd.s32 1, %s564
                $region69: #{tpu_custom_call.1} parent=62 // loop_footer_branch
                  %563 = sbr.rel target = $region65
                $region70: #{tpu_custom_call.1} parent=62 // loop_exit
                  _
              $region63: #{tpu_custom_call.1} parent=47 // pred_fallthru
                _
              // Predicated region
              $region71: #{tpu_custom_call.1} parent=47 // pred_check
                _
              $region72: #{tpu_custom_call.1} parent=47 // pred_check_branch
                %668 = sbr.rel target = $region74
              $region73: #{tpu_custom_call.1} parent=47 // pred_region
                _
              $region74: #{tpu_custom_call.1} parent=47 // pred_fallthru
                _
            $region48: #{tpu_custom_call.1} parent=43 // pred_fallthru
              _
            // Predicated region
            $region49: #{tpu_custom_call.1} parent=43 // pred_check
              _
            $region50: #{tpu_custom_call.1} parent=43 // pred_check_branch
              %455 = sbr.rel target = $region52
            $region51: #{tpu_custom_call.1} parent=43 // pred_region
              loop: start=0, step=1, limit=1
              $region53: #{tpu_custom_call.1} parent=51 // loop_pre_header
                _
              $region54: #{tpu_custom_call.1} parent=51 // loop_header
                %s458 = sphi 0, %s462
                %p459 = scmp.ge.s32.totalorder %s458, 1
                %s463 = sphi %s441, %s441
                %s464 = sphi %s449, %s449
              $region55: #{tpu_custom_call.1} parent=51 // loop_header_branch
                %461 = sbr.rel (%p459) target = $region59
              $region56: #{tpu_custom_call.1} parent=51 // loop_body
                %v465 = vld [vmem:[%s463] sm:$0xff]
                %466 = vst [vmem:[%s464] sm:$0xff] %v465
                %v467 = vld [vmem:[%s463 + $0x8] sm:$0xff]
                %468 = vst [vmem:[%s464 + $0x8] sm:$0xff] %v467
                %v469 = vld [vmem:[%s463 + $0x10] sm:$0xff]
                %470 = vst [vmem:[%s464 + $0x10] sm:$0xff] %v469
                %v471 = vld [vmem:[%s463 + $0x18] sm:$0xff]
                %472 = vst [vmem:[%s464 + $0x18] sm:$0xff] %v471
                %v473 = vld [vmem:[%s463 + $0x20] sm:$0xff]
                %474 = vst [vmem:[%s464 + $0x20] sm:$0xff] %v473
                %v475 = vld [vmem:[%s463 + $0x28] sm:$0xff]
                %476 = vst [vmem:[%s464 + $0x28] sm:$0xff] %v475
                %v477 = vld [vmem:[%s463 + $0x30] sm:$0xff]
                %478 = vst [vmem:[%s464 + $0x30] sm:$0xff] %v477
                %v479 = vld [vmem:[%s463 + $0x38] sm:$0xff]
                %480 = vst [vmem:[%s464 + $0x38] sm:$0xff] %v479
                %v481 = vld [vmem:[%s463 + $0x40] sm:$0xff]
                %482 = vst [vmem:[%s464 + $0x40] sm:$0xff] %v481
                %v483 = vld [vmem:[%s463 + $0x48] sm:$0xff]
                %484 = vst [vmem:[%s464 + $0x48] sm:$0xff] %v483
                %v485 = vld [vmem:[%s463 + $0x50] sm:$0xff]
                %486 = vst [vmem:[%s464 + $0x50] sm:$0xff] %v485
                %v487 = vld [vmem:[%s463 + $0x58] sm:$0xff]
                %488 = vst [vmem:[%s464 + $0x58] sm:$0xff] %v487
                %v489 = vld [vmem:[%s463 + $0x60] sm:$0xff]
                %490 = vst [vmem:[%s464 + $0x60] sm:$0xff] %v489
                %v491 = vld [vmem:[%s463 + $0x68] sm:$0xff]
                %492 = vst [vmem:[%s464 + $0x68] sm:$0xff] %v491
                %v493 = vld [vmem:[%s463 + $0x70] sm:$0xff]
                %494 = vst [vmem:[%s464 + $0x70] sm:$0xff] %v493
                %v495 = vld [vmem:[%s463 + $0x78] sm:$0xff]
                %496 = vst [vmem:[%s464 + $0x78] sm:$0xff] %v495
                %v497 = vld [vmem:[%s463 + $0x80] sm:$0xff]
                %498 = vst [vmem:[%s464 + $0x100] sm:$0xff] %v497
                %v499 = vld [vmem:[%s463 + $0x88] sm:$0xff]
                %500 = vst [vmem:[%s464 + $0x108] sm:$0xff] %v499
                %v501 = vld [vmem:[%s463 + $0x90] sm:$0xff]
                %502 = vst [vmem:[%s464 + $0x110] sm:$0xff] %v501
                %v503 = vld [vmem:[%s463 + $0x98] sm:$0xff]
                %504 = vst [vmem:[%s464 + $0x118] sm:$0xff] %v503
                %v505 = vld [vmem:[%s463 + $0xa0] sm:$0xff]
                %506 = vst [vmem:[%s464 + $0x120] sm:$0xff] %v505
                %v507 = vld [vmem:[%s463 + $0xa8] sm:$0xff]
                %508 = vst [vmem:[%s464 + $0x128] sm:$0xff] %v507
                %v509 = vld [vmem:[%s463 + $0xb0] sm:$0xff]
                %510 = vst [vmem:[%s464 + $0x130] sm:$0xff] %v509
                %v511 = vld [vmem:[%s463 + $0xb8] sm:$0xff]
                %512 = vst [vmem:[%s464 + $0x138] sm:$0xff] %v511
                %v513 = vld [vmem:[%s463 + $0xc0] sm:$0xff]
                %514 = vst [vmem:[%s464 + $0x140] sm:$0xff] %v513
                %v515 = vld [vmem:[%s463 + $0xc8] sm:$0xff]
                %516 = vst [vmem:[%s464 + $0x148] sm:$0xff] %v515
                %v517 = vld [vmem:[%s463 + $0xd0] sm:$0xff]
                %518 = vst [vmem:[%s464 + $0x150] sm:$0xff] %v517
                %v519 = vld [vmem:[%s463 + $0xd8] sm:$0xff]
                %520 = vst [vmem:[%s464 + $0x158] sm:$0xff] %v519
                %v521 = vld [vmem:[%s463 + $0xe0] sm:$0xff]
                %522 = vst [vmem:[%s464 + $0x160] sm:$0xff] %v521
                %v523 = vld [vmem:[%s463 + $0xe8] sm:$0xff]
                %524 = vst [vmem:[%s464 + $0x168] sm:$0xff] %v523
                %v525 = vld [vmem:[%s463 + $0xf0] sm:$0xff]
                %526 = vst [vmem:[%s464 + $0x170] sm:$0xff] %v525
                %v527 = vld [vmem:[%s463 + $0xf8] sm:$0xff]
                %528 = vst [vmem:[%s464 + $0x178] sm:$0xff] %v527
                %v529 = vld [vmem:[%s463 + $0x100] sm:$0xff]
                %530 = vst [vmem:[%s464 + $0x200] sm:$0xff] %v529
                %v531 = vld [vmem:[%s463 + $0x108] sm:$0xff]
                %532 = vst [vmem:[%s464 + $0x208] sm:$0xff] %v531
                %v533 = vld [vmem:[%s463 + $0x110] sm:$0xff]
                %534 = vst [vmem:[%s464 + $0x210] sm:$0xff] %v533
                %v535 = vld [vmem:[%s463 + $0x118] sm:$0xff]
                %536 = vst [vmem:[%s464 + $0x218] sm:$0xff] %v535
                %v537 = vld [vmem:[%s463 + $0x120] sm:$0xff]
                %538 = vst [vmem:[%s464 + $0x220] sm:$0xff] %v537
                %v539 = vld [vmem:[%s463 + $0x128] sm:$0xff]
                %540 = vst [vmem:[%s464 + $0x228] sm:$0xff] %v539
                %v541 = vld [vmem:[%s463 + $0x130] sm:$0xff]
                %542 = vst [vmem:[%s464 + $0x230] sm:$0xff] %v541
                %v543 = vld [vmem:[%s463 + $0x138] sm:$0xff]
                %544 = vst [vmem:[%s464 + $0x238] sm:$0xff] %v543
                %v545 = vld [vmem:[%s463 + $0x140] sm:$0xff]
                %546 = vst [vmem:[%s464 + $0x240] sm:$0xff] %v545
                %v547 = vld [vmem:[%s463 + $0x148] sm:$0xff]
                %548 = vst [vmem:[%s464 + $0x248] sm:$0xff] %v547
                %v549 = vld [vmem:[%s463 + $0x150] sm:$0xff]
                %550 = vst [vmem:[%s464 + $0x250] sm:$0xff] %v549
                %v551 = vld [vmem:[%s463 + $0x158] sm:$0xff]
                %552 = vst [vmem:[%s464 + $0x258] sm:$0xff] %v551
                %v553 = vld [vmem:[%s463 + $0x160] sm:$0xff]
                %554 = vst [vmem:[%s464 + $0x260] sm:$0xff] %v553
                %v555 = vld [vmem:[%s463 + $0x168] sm:$0xff]
                %556 = vst [vmem:[%s464 + $0x268] sm:$0xff] %v555
                %v557 = vld [vmem:[%s463 + $0x170] sm:$0xff]
                %558 = vst [vmem:[%s464 + $0x270] sm:$0xff] %v557
                %v559 = vld [vmem:[%s463 + $0x178] sm:$0xff]
                %560 = vst [vmem:[%s464 + $0x278] sm:$0xff] %v559
              $region57: #{tpu_custom_call.1} parent=51 // loop_footer
                %s462 = sadd.s32 1, %s458
              $region58: #{tpu_custom_call.1} parent=51 // loop_footer_branch
                %457 = sbr.rel target = $region54
              $region59: #{tpu_custom_call.1} parent=51 // loop_exit
                _
            $region52: #{tpu_custom_call.1} parent=43 // pred_fallthru
              _
          $region44: #{tpu_custom_call.1} parent=39 // pred_fallthru
            _
          %669 = vnop
        $region40: #{tpu_custom_call.1} parent=31 // pred_fallthru
          _
      $region32: #{tpu_custom_call.1} parent=5 // pred_fallthru
        _
      %p670 = scmp.le.s32.totalorder 2, %s12
      // Predicated region
      $region75: #{tpu_custom_call.1} parent=5 // pred_check
        %p671 = pneg %p670
      $region76: #{tpu_custom_call.1} parent=5 // pred_check_branch
        %673 = sbr.rel (%p671) target = $region78
      $region77: #{tpu_custom_call.1} parent=5 // pred_region
        %s674 = ssub.s32 %s12, 2
        // Predicated region
        $region79: #{tpu_custom_call.1} parent=77 // pred_check
          %p675 = pneg %p130
        $region80: #{tpu_custom_call.1} parent=77 // pred_check_branch
          %677 = sbr.rel (%p675) target = $region82
        $region81: #{tpu_custom_call.1} parent=77 // pred_region
          %s678 = sand.u32 %s115, 1
          %s679 = sand.u32 %s115, 1
          %s680 = smul.addr %s679, 384
          %s681 = scalar_lea.vmem [#allocation4], %s680
        $region82: #{tpu_custom_call.1} parent=77 // pred_fallthru
          _
      $region78: #{tpu_custom_call.1} parent=5 // pred_fallthru
        _
    $region6: #{tpu_custom_call.1} parent=1 // loop_footer
      %s16 = sadd.s32 1, %s12
    $region7: #{tpu_custom_call.1} parent=1 // loop_footer_branch
      %11 = sbr.rel target = $region3
    $region8: #{tpu_custom_call.1} parent=1 // loop_exit
      _
    %682 = vsyncpa [#allocation3], 1
    %s683 = scalar_lea.sflag [#allocation3], 1
    %684 = vsyncpa %s683, 1

</llo_original>
